<compile_context>
chip_gen: v6e
topology: v6e:2x2x1
jax: 0.10.0
libtpu: 0.0.40
codegen_flags: <defaults>
</compile_context>

<pallas_src>
import jax
import jax.numpy as jnp
import numpy as np
from jax.experimental import pallas as pl
from jax.experimental.pallas import tpu as pltpu

_LANE = 128
_SUB = 8


def _sparse_loss_kernel(n_ref, p_ref, t_ref, out_ref,
                        m_acc, s_acc, st_acc, stp_acc, abs_acc, cnt_acc):
    i = pl.program_id(0)
    gb = p_ref.shape[0]                      # row-groups in this block
    neg_inf = jnp.float32(-jnp.inf)

    @pl.when(i == 0)
    def _init():
        m_acc[...] = jnp.full_like(m_acc, -jnp.inf)
        s_acc[...] = jnp.zeros_like(s_acc)
        st_acc[...] = jnp.zeros_like(st_acc)
        stp_acc[...] = jnp.zeros_like(stp_acc)
        abs_acc[...] = jnp.zeros_like(abs_acc)
        cnt_acc[...] = jnp.zeros_like(cnt_acc)

    # upcast per-tile in VMEM (inputs stay in native dtype in HBM)
    p = p_ref[...].astype(jnp.float32)       # (gb, 8, 128)
    t = t_ref[...].astype(jnp.float32)

    # global flattened index of each element -> validity mask (replaces the
    # old f32 `valid` input array).
    n = n_ref[0]
    g = jax.lax.broadcasted_iota(jnp.int32, p.shape, 0)
    r = jax.lax.broadcasted_iota(jnp.int32, p.shape, 1)
    c = jax.lax.broadcasted_iota(jnp.int32, p.shape, 2)
    gidx = ((i * gb + g) * _SUB + r) * _LANE + c
    valid = gidx < n

    nz = jnp.logical_and(t != 0.0, valid)    # cross-entropy (soft-target) elems
    zm = jnp.logical_and(t == 0.0, valid)    # L1 elems

    # ---- online softmax accumulation over nz, per (8,128) vreg slot ----
    logits = jnp.where(nz, p, neg_inf)
    tile_max = jnp.max(logits, axis=0)                   # (8,128), elementwise over gb
    m_old = m_acc[...]
    m_new = jnp.maximum(m_old, tile_max)
    safe_m = jnp.where(m_new == neg_inf, 0.0, m_new)     # avoid (-inf)-(-inf)
    e = jnp.where(nz, jnp.exp(p - safe_m[None]), 0.0)
    s_acc[...] = s_acc[...] * jnp.exp(m_old - safe_m) + jnp.sum(e, axis=0)
    m_acc[...] = m_new

    # ---- linear accumulators (all elementwise + leading-axis sums: VPU only) ----
    st_acc[...] += jnp.sum(jnp.where(nz, t, 0.0), axis=0)
    stp_acc[...] += jnp.sum(jnp.where(nz, t * p, 0.0), axis=0)
    abs_acc[...] += jnp.sum(jnp.where(zm, jnp.abs(p), 0.0), axis=0)
    cnt_acc[...] += jnp.sum(zm.astype(jnp.float32), axis=0)

    # ---- finalize: single cross-lane (XLU) reduce + log/div epilogue ----
    @pl.when(i == pl.num_programs(0) - 1)
    def _fin():
        m_all = jnp.max(m_acc[...])
        safe_all = jnp.where(m_all == neg_inf, 0.0, m_all)
        sumexp = jnp.sum(s_acc[...] * jnp.exp(m_acc[...] - safe_all))
        lse = jnp.log(sumexp) + m_all
        sum_t = jnp.sum(st_acc[...])
        sum_tp = jnp.sum(stp_acc[...])
        # ce = sum_nz t*(lse - p); guarded (-> 0) if there are no nz elements.
        ce = jnp.where(sumexp > 0.0, lse * sum_t - sum_tp, 0.0)
        # mean |p| over zero-target elements (NaN if none, matching torch's
        # mean over an empty tensor).
        mae = jnp.sum(abs_acc[...]) / jnp.sum(cnt_acc[...])
        out_ref[...] = jnp.broadcast_to(ce + mae, (1, 1)).astype(jnp.float32)


def custom_sparse_loss(prediction, target, *, block_rows=512):
    assert prediction.shape == target.shape
    p = prediction.reshape(-1)
    t = target.reshape(-1)
    n = p.shape[0]

    chunk = _SUB * _LANE                     # 1024 elements per (8,128) row-group
    n_pad = ((n + chunk - 1) // chunk) * chunk
    pad = n_pad - n
    if pad:  # at most 1023 elements; padded region is masked out in-kernel
        p = jnp.concatenate([p, jnp.zeros((pad,), p.dtype)])
        t = jnp.concatenate([t, jnp.zeros((pad,), t.dtype)])

    r8 = n_pad // chunk                      # number of (8,128) row-groups
    p3 = p.reshape(r8, _SUB, _LANE)          # free views of contiguous data
    t3 = t.reshape(r8, _SUB, _LANE)

    # row-groups per grid step: 64 groups = 512 rows = 256 KiB f32 per input
    # per pipeline buffer -> fits comfortably on v5e/v6e/v7x.
    gb = min(max(block_rows // _SUB, 1), r8)
    grid = (pl.cdiv(r8, gb),)
    n_arr = jnp.asarray([n], dtype=jnp.int32)

    out = pl.pallas_call(
        _sparse_loss_kernel,
        out_shape=jax.ShapeDtypeStruct((1, 1), jnp.float32),
        grid_spec=pltpu.PrefetchScalarGridSpec(
            num_scalar_prefetch=1,
            grid=grid,
            in_specs=[
                pl.BlockSpec((gb, _SUB, _LANE), lambda i, n_s: (i, 0, 0)),
                pl.BlockSpec((gb, _SUB, _LANE), lambda i, n_s: (i, 0, 0)),
            ],
            out_specs=pl.BlockSpec((1, 1), lambda i, n_s: (0, 0)),
            scratch_shapes=[pltpu.VMEM((_SUB, _LANE), jnp.float32)
                            for _ in range(6)],
        ),
        compiler_params=pltpu.CompilerParams(
            dimension_semantics=("arbitrary",)),
    )(n_arr, p3, t3)
    return out[0, 0]


if __name__ == "__main__":
    key = jax.random.PRNGKey(0)
    k1, k2, k3 = jax.random.split(key, 3)

    shape = (2, 4, 16, 16)  # NCHW-style small shape; loss is shape-agnostic
    prediction = jax.random.normal(k1, shape, dtype=jnp.float32)
    tvals = jax.random.normal(k2, shape, dtype=jnp.float32)
    keep = jax.random.uniform(k3, shape) > 0.5
    target = jnp.where(keep, tvals, 0.0)  # mix of zero / non-zero targets

    loss = custom_sparse_loss(prediction, target)
    jax.block_until_ready(loss)

    # NumPy reference mirroring the exact PyTorch masked-index semantics.
    pn = np.asarray(prediction).reshape(-1)
    tn = np.asarray(target).reshape(-1)
    nz = tn != 0
    pm = pn[nz]
    logits = pm - pm.max()
    logsm = logits - np.log(np.exp(logits).sum())
    ce_ref = -(tn[nz] * logsm).sum()
    mae_ref = np.abs(pn[~nz]).mean()
    ref = ce_ref + mae_ref

    assert np.allclose(float(loss), ref, rtol=1e-4, atol=1e-4), (float(loss), float(ref))
    print("KERNEL_OK")
</pallas_src>

<mosaic_0001>
module attributes {stable_mosaic.version = 11 : i64} {
  func.func @_sparse_loss_kernel(%arg0: i32, %arg1: memref<1xi32, #tpu.memory_space<smem>>, %arg2: memref<2x8x128xf32, #tpu.memory_space<vmem>>, %arg3: memref<2x8x128xf32, #tpu.memory_space<vmem>>, %arg4: memref<1x1xf32, #tpu.memory_space<vmem>>, %arg5: memref<8x128xf32, #tpu.memory_space<vmem>>, %arg6: memref<8x128xf32, #tpu.memory_space<vmem>>, %arg7: memref<8x128xf32, #tpu.memory_space<vmem>>, %arg8: memref<8x128xf32, #tpu.memory_space<vmem>>, %arg9: memref<8x128xf32, #tpu.memory_space<vmem>>, %arg10: memref<8x128xf32, #tpu.memory_space<vmem>>) attributes {dimension_semantics = [#tpu.dimension_semantics<arbitrary>], iteration_bounds = array<i64: 1>, scalar_prefetch = 1 : i64, scratch_operands = 6 : i64, tpu.core_type = #tpu.core_type<tc>, window_params = [{transform_indices = @transform_0, window_bounds = array<i64: 2, 8, 128>}, {transform_indices = @transform_1, window_bounds = array<i64: 2, 8, 128>}, {pipeline_mode = #tpu.pipeline_mode<synchronous>, transform_indices = @transform_2, window_bounds = array<i64: 1, 1>}]} {
    %c0_i32 = arith.constant 0 : i32
    %0 = arith.cmpi eq, %arg0, %c0_i32 : i32
    %1 = arith.extui %0 : i1 to i32
    %c0_i32_0 = arith.constant 0 : i32
    %2 = arith.cmpi ne, %1, %c0_i32_0 : i32
    scf.if %2 {
      %cst_48 = arith.constant 0xFF800000 : f32
      %78 = vector.broadcast %cst_48 : f32 to vector<8x128xf32>
      %c0_49 = arith.constant 0 : index
      %c0_50 = arith.constant 0 : index
      %79 = vector.load %arg5[%c0_49, %c0_50] : memref<8x128xf32, #tpu.memory_space<vmem>>, vector<8x128xf32>
      tpu.vector_store %arg5[%c0_49, %c0_50], %78 {strides = array<i32>} : memref<8x128xf32, #tpu.memory_space<vmem>>, vector<8x128xf32>,
      %cst_51 = arith.constant 0.000000e+00 : f32
      %80 = vector.broadcast %cst_51 : f32 to vector<8x128xf32>
      %c0_52 = arith.constant 0 : index
      %c0_53 = arith.constant 0 : index
      %81 = vector.load %arg6[%c0_52, %c0_53] : memref<8x128xf32, #tpu.memory_space<vmem>>, vector<8x128xf32>
      tpu.vector_store %arg6[%c0_52, %c0_53], %80 {strides = array<i32>} : memref<8x128xf32, #tpu.memory_space<vmem>>, vector<8x128xf32>,
      %cst_54 = arith.constant 0.000000e+00 : f32
      %82 = vector.broadcast %cst_54 : f32 to vector<8x128xf32>
      %c0_55 = arith.constant 0 : index
      %c0_56 = arith.constant 0 : index
      %83 = vector.load %arg7[%c0_55, %c0_56] : memref<8x128xf32, #tpu.memory_space<vmem>>, vector<8x128xf32>
      tpu.vector_store %arg7[%c0_55, %c0_56], %82 {strides = array<i32>} : memref<8x128xf32, #tpu.memory_space<vmem>>, vector<8x128xf32>,
      %cst_57 = arith.constant 0.000000e+00 : f32
      %84 = vector.broadcast %cst_57 : f32 to vector<8x128xf32>
      %c0_58 = arith.constant 0 : index
      %c0_59 = arith.constant 0 : index
      %85 = vector.load %arg8[%c0_58, %c0_59] : memref<8x128xf32, #tpu.memory_space<vmem>>, vector<8x128xf32>
      tpu.vector_store %arg8[%c0_58, %c0_59], %84 {strides = array<i32>} : memref<8x128xf32, #tpu.memory_space<vmem>>, vector<8x128xf32>,
      %cst_60 = arith.constant 0.000000e+00 : f32
      %86 = vector.broadcast %cst_60 : f32 to vector<8x128xf32>
      %c0_61 = arith.constant 0 : index
      %c0_62 = arith.constant 0 : index
      %87 = vector.load %arg9[%c0_61, %c0_62] : memref<8x128xf32, #tpu.memory_space<vmem>>, vector<8x128xf32>
      tpu.vector_store %arg9[%c0_61, %c0_62], %86 {strides = array<i32>} : memref<8x128xf32, #tpu.memory_space<vmem>>, vector<8x128xf32>,
      %cst_63 = arith.constant 0.000000e+00 : f32
      %88 = vector.broadcast %cst_63 : f32 to vector<8x128xf32>
      %c0_64 = arith.constant 0 : index
      %c0_65 = arith.constant 0 : index
      %89 = vector.load %arg10[%c0_64, %c0_65] : memref<8x128xf32, #tpu.memory_space<vmem>>, vector<8x128xf32>
      tpu.vector_store %arg10[%c0_64, %c0_65], %88 {strides = array<i32>} : memref<8x128xf32, #tpu.memory_space<vmem>>, vector<8x128xf32>,
    } else {
    }
    %c0 = arith.constant 0 : index
    %c0_1 = arith.constant 0 : index
    %c0_2 = arith.constant 0 : index
    %3 = vector.load %arg2[%c0, %c0_1, %c0_2] : memref<2x8x128xf32, #tpu.memory_space<vmem>>, vector<2x8x128xf32>
    %c0_3 = arith.constant 0 : index
    %c0_4 = arith.constant 0 : index
    %c0_5 = arith.constant 0 : index
    %4 = vector.load %arg3[%c0_3, %c0_4, %c0_5] : memref<2x8x128xf32, #tpu.memory_space<vmem>>, vector<2x8x128xf32>
    %c0_6 = arith.constant 0 : index
    %5 = memref.load %arg1[%c0_6] : memref<1xi32, #tpu.memory_space<smem>>
    %6 = tpu.iota {dimensions = array<i32: 0>} : vector<2x8x128xi32>
    %7 = tpu.iota {dimensions = array<i32: 1>} : vector<2x8x128xi32>
    %8 = tpu.iota {dimensions = array<i32: 2>} : vector<2x8x128xi32>
    %c2_i32 = arith.constant 2 : i32
    %9 = arith.muli %arg0, %c2_i32 : i32
    %10 = vector.broadcast %9 : i32 to vector<2x8x128xi32>
    %11 = arith.addi %10, %6 : vector<2x8x128xi32>
    %c8_i32 = arith.constant 8 : i32
    %12 = vector.broadcast %c8_i32 : i32 to vector<2x8x128xi32>
    %13 = arith.muli %11, %12 : vector<2x8x128xi32>
    %14 = arith.addi %13, %7 : vector<2x8x128xi32>
    %c128_i32 = arith.constant 128 : i32
    %15 = vector.broadcast %c128_i32 : i32 to vector<2x8x128xi32>
    %16 = arith.muli %14, %15 : vector<2x8x128xi32>
    %17 = arith.addi %16, %8 : vector<2x8x128xi32>
    %18 = vector.broadcast %5 : i32 to vector<2x8x128xi32>
    %19 = arith.cmpi slt, %17, %18 : vector<2x8x128xi32>
    %cst = arith.constant 0.000000e+00 : f32
    %20 = vector.broadcast %cst : f32 to vector<2x8x128xf32>
    %21 = arith.cmpf one, %4, %20 : vector<2x8x128xf32>
    %22 = arith.andi %21, %19 : vector<2x8x128xi1>
    %cst_7 = arith.constant 0.000000e+00 : f32
    %23 = vector.broadcast %cst_7 : f32 to vector<2x8x128xf32>
    %24 = arith.cmpf oeq, %4, %23 : vector<2x8x128xf32>
    %25 = arith.andi %24, %19 : vector<2x8x128xi1>
    %cst_8 = arith.constant 0xFF800000 : f32
    %26 = vector.broadcast %cst_8 : f32 to vector<2x8x128xf32>
    %27 = arith.select %22, %3, %26 : vector<2x8x128xi1>, vector<2x8x128xf32>
    %cst_9 = arith.constant dense<0xFF800000> : vector<8x128xf32>
    %28 = vector.multi_reduction <maximumf>, %27, %cst_9 [0] : vector<2x8x128xf32> to vector<8x128xf32>
    %c0_10 = arith.constant 0 : index
    %c0_11 = arith.constant 0 : index
    %29 = vector.load %arg5[%c0_10, %c0_11] : memref<8x128xf32, #tpu.memory_space<vmem>>, vector<8x128xf32>
    %30 = arith.maximumf %29, %28 : vector<8x128xf32>
    %cst_12 = arith.constant 0xFF800000 : f32
    %31 = vector.broadcast %cst_12 : f32 to vector<8x128xf32>
    %32 = arith.cmpf oeq, %30, %31 : vector<8x128xf32>
    %cst_13 = arith.constant 0.000000e+00 : f32
    %33 = vector.broadcast %cst_13 : f32 to vector<8x128xf32>
    %34 = arith.select %32, %33, %30 : vector<8x128xi1>, vector<8x128xf32>
    %35 = vector.shape_cast %34 : vector<8x128xf32> to vector<1x8x128xf32>
    %36 = vector.broadcast %35 : vector<1x8x128xf32> to vector<2x8x128xf32>
    %37 = arith.subf %3, %36 : vector<2x8x128xf32>
    %38 = math.exp %37 : vector<2x8x128xf32>
    %cst_14 = arith.constant 0.000000e+00 : f32
    %39 = vector.broadcast %cst_14 : f32 to vector<2x8x128xf32>
    %40 = arith.select %22, %38, %39 : vector<2x8x128xi1>, vector<2x8x128xf32>
    %c0_15 = arith.constant 0 : index
    %c0_16 = arith.constant 0 : index
    %41 = vector.load %arg6[%c0_15, %c0_16] : memref<8x128xf32, #tpu.memory_space<vmem>>, vector<8x128xf32>
    %42 = arith.subf %29, %34 : vector<8x128xf32>
    %43 = math.exp %42 : vector<8x128xf32>
    %44 = arith.mulf %41, %43 : vector<8x128xf32>
    %cst_17 = arith.constant dense<0.000000e+00> : vector<8x128xf32>
    %45 = vector.multi_reduction <add>, %40, %cst_17 [0] : vector<2x8x128xf32> to vector<8x128xf32>
    %46 = arith.addf %44, %45 : vector<8x128xf32>
    %c0_18 = arith.constant 0 : index
    %c0_19 = arith.constant 0 : index
    %47 = vector.load %arg6[%c0_18, %c0_19] : memref<8x128xf32, #tpu.memory_space<vmem>>, vector<8x128xf32>
    tpu.vector_store %arg6[%c0_18, %c0_19], %46 {strides = array<i32>} : memref<8x128xf32, #tpu.memory_space<vmem>>, vector<8x128xf32>,
    %c0_20 = arith.constant 0 : index
    %c0_21 = arith.constant 0 : index
    %48 = vector.load %arg5[%c0_20, %c0_21] : memref<8x128xf32, #tpu.memory_space<vmem>>, vector<8x128xf32>
    tpu.vector_store %arg5[%c0_20, %c0_21], %30 {strides = array<i32>} : memref<8x128xf32, #tpu.memory_space<vmem>>, vector<8x128xf32>,
    %c0_22 = arith.constant 0 : index
    %c0_23 = arith.constant 0 : index
    %49 = vector.load %arg7[%c0_22, %c0_23] : memref<8x128xf32, #tpu.memory_space<vmem>>, vector<8x128xf32>
    %cst_24 = arith.constant 0.000000e+00 : f32
    %50 = vector.broadcast %cst_24 : f32 to vector<2x8x128xf32>
    %51 = arith.select %22, %4, %50 : vector<2x8x128xi1>, vector<2x8x128xf32>
    %cst_25 = arith.constant dense<0.000000e+00> : vector<8x128xf32>
    %52 = vector.multi_reduction <add>, %51, %cst_25 [0] : vector<2x8x128xf32> to vector<8x128xf32>
    %53 = arith.addf %49, %52 : vector<8x128xf32>
    %c0_26 = arith.constant 0 : index
    %c0_27 = arith.constant 0 : index
    %54 = vector.load %arg7[%c0_26, %c0_27] : memref<8x128xf32, #tpu.memory_space<vmem>>, vector<8x128xf32>
    tpu.vector_store %arg7[%c0_26, %c0_27], %53 {strides = array<i32>} : memref<8x128xf32, #tpu.memory_space<vmem>>, vector<8x128xf32>,
    %c0_28 = arith.constant 0 : index
    %c0_29 = arith.constant 0 : index
    %55 = vector.load %arg8[%c0_28, %c0_29] : memref<8x128xf32, #tpu.memory_space<vmem>>, vector<8x128xf32>
    %56 = arith.mulf %4, %3 : vector<2x8x128xf32>
    %cst_30 = arith.constant 0.000000e+00 : f32
    %57 = vector.broadcast %cst_30 : f32 to vector<2x8x128xf32>
    %58 = arith.select %22, %56, %57 : vector<2x8x128xi1>, vector<2x8x128xf32>
    %cst_31 = arith.constant dense<0.000000e+00> : vector<8x128xf32>
    %59 = vector.multi_reduction <add>, %58, %cst_31 [0] : vector<2x8x128xf32> to vector<8x128xf32>
    %60 = arith.addf %55, %59 : vector<8x128xf32>
    %c0_32 = arith.constant 0 : index
    %c0_33 = arith.constant 0 : index
    %61 = vector.load %arg8[%c0_32, %c0_33] : memref<8x128xf32, #tpu.memory_space<vmem>>, vector<8x128xf32>
    tpu.vector_store %arg8[%c0_32, %c0_33], %60 {strides = array<i32>} : memref<8x128xf32, #tpu.memory_space<vmem>>, vector<8x128xf32>,
    %c0_34 = arith.constant 0 : index
    %c0_35 = arith.constant 0 : index
    %62 = vector.load %arg9[%c0_34, %c0_35] : memref<8x128xf32, #tpu.memory_space<vmem>>, vector<8x128xf32>
    %63 = math.absf %3 : vector<2x8x128xf32>
    %cst_36 = arith.constant 0.000000e+00 : f32
    %64 = vector.broadcast %cst_36 : f32 to vector<2x8x128xf32>
    %65 = arith.select %25, %63, %64 : vector<2x8x128xi1>, vector<2x8x128xf32>
    %cst_37 = arith.constant dense<0.000000e+00> : vector<8x128xf32>
    %66 = vector.multi_reduction <add>, %65, %cst_37 [0] : vector<2x8x128xf32> to vector<8x128xf32>
    %67 = arith.addf %62, %66 : vector<8x128xf32>
    %c0_38 = arith.constant 0 : index
    %c0_39 = arith.constant 0 : index
    %68 = vector.load %arg9[%c0_38, %c0_39] : memref<8x128xf32, #tpu.memory_space<vmem>>, vector<8x128xf32>
    tpu.vector_store %arg9[%c0_38, %c0_39], %67 {strides = array<i32>} : memref<8x128xf32, #tpu.memory_space<vmem>>, vector<8x128xf32>,
    %c0_40 = arith.constant 0 : index
    %c0_41 = arith.constant 0 : index
    %69 = vector.load %arg10[%c0_40, %c0_41] : memref<8x128xf32, #tpu.memory_space<vmem>>, vector<8x128xf32>
    %70 = arith.extui %25 : vector<2x8x128xi1> to vector<2x8x128xi32>
    %71 = arith.sitofp %70 : vector<2x8x128xi32> to vector<2x8x128xf32>
    %cst_42 = arith.constant dense<0.000000e+00> : vector<8x128xf32>
    %72 = vector.multi_reduction <add>, %71, %cst_42 [0] : vector<2x8x128xf32> to vector<8x128xf32>
    %73 = arith.addf %69, %72 : vector<8x128xf32>
    %c0_43 = arith.constant 0 : index
    %c0_44 = arith.constant 0 : index
    %74 = vector.load %arg10[%c0_43, %c0_44] : memref<8x128xf32, #tpu.memory_space<vmem>>, vector<8x128xf32>
    tpu.vector_store %arg10[%c0_43, %c0_44], %73 {strides = array<i32>} : memref<8x128xf32, #tpu.memory_space<vmem>>, vector<8x128xf32>,
    %c0_i32_45 = arith.constant 0 : i32
    %75 = arith.cmpi eq, %arg0, %c0_i32_45 : i32
    %76 = arith.extui %75 : i1 to i32
    %cst_46 = arith.constant 0xFF800000 : f32
    %c0_i32_47 = arith.constant 0 : i32
    %77 = arith.cmpi ne, %76, %c0_i32_47 : i32
    scf.if %77 {
      %c0_48 = arith.constant 0 : index
      %c0_49 = arith.constant 0 : index
      %78 = vector.load %arg5[%c0_48, %c0_49] : memref<8x128xf32, #tpu.memory_space<vmem>>, vector<8x128xf32>
      %79 = vector.shape_cast %78 : vector<8x128xf32> to vector<1x8x128xf32>
      %cst_50 = arith.constant dense<0xFF800000> : vector<1xf32>
      %80 = vector.multi_reduction <maximumf>, %79, %cst_50 [1, 2] : vector<1x8x128xf32> to vector<1xf32>
      %81 = vector.shape_cast %80 : vector<1xf32> to vector<1x1x1xf32>
      %82 = vector.extract %81[0, 0, 0] : f32 from vector<1x1x1xf32>
      %83 = arith.cmpf oeq, %82, %cst_46 : f32
      %cst_51 = arith.constant 0.000000e+00 : f32
      %84 = arith.select %83, %cst_51, %82 : f32
      %c0_52 = arith.constant 0 : index
      %c0_53 = arith.constant 0 : index
      %85 = vector.load %arg6[%c0_52, %c0_53] : memref<8x128xf32, #tpu.memory_space<vmem>>, vector<8x128xf32>
      %c0_54 = arith.constant 0 : index
      %c0_55 = arith.constant 0 : index
      %86 = vector.load %arg5[%c0_54, %c0_55] : memref<8x128xf32, #tpu.memory_space<vmem>>, vector<8x128xf32>
      %87 = vector.broadcast %84 : f32 to vector<8x128xf32>
      %88 = arith.subf %86, %87 : vector<8x128xf32>
      %89 = math.exp %88 : vector<8x128xf32>
      %90 = arith.mulf %85, %89 : vector<8x128xf32>
      %91 = vector.shape_cast %90 : vector<8x128xf32> to vector<1x8x128xf32>
      %cst_56 = arith.constant dense<0.000000e+00> : vector<1xf32>
      %92 = vector.multi_reduction <add>, %91, %cst_56 [1, 2] : vector<1x8x128xf32> to vector<1xf32>
      %93 = vector.shape_cast %92 : vector<1xf32> to vector<1x1x1xf32>
      %94 = vector.extract %93[0, 0, 0] : f32 from vector<1x1x1xf32>
      %95 = math.log %94 : f32
      %96 = arith.addf %95, %82 : f32
      %c0_57 = arith.constant 0 : index
      %c0_58 = arith.constant 0 : index
      %97 = vector.load %arg7[%c0_57, %c0_58] : memref<8x128xf32, #tpu.memory_space<vmem>>, vector<8x128xf32>
      %98 = vector.shape_cast %97 : vector<8x128xf32> to vector<1x8x128xf32>
      %cst_59 = arith.constant dense<0.000000e+00> : vector<1xf32>
      %99 = vector.multi_reduction <add>, %98, %cst_59 [1, 2] : vector<1x8x128xf32> to vector<1xf32>
      %100 = vector.shape_cast %99 : vector<1xf32> to vector<1x1x1xf32>
      %101 = vector.extract %100[0, 0, 0] : f32 from vector<1x1x1xf32>
      %c0_60 = arith.constant 0 : index
      %c0_61 = arith.constant 0 : index
      %102 = vector.load %arg8[%c0_60, %c0_61] : memref<8x128xf32, #tpu.memory_space<vmem>>, vector<8x128xf32>
      %103 = vector.shape_cast %102 : vector<8x128xf32> to vector<1x8x128xf32>
      %cst_62 = arith.constant dense<0.000000e+00> : vector<1xf32>
      %104 = vector.multi_reduction <add>, %103, %cst_62 [1, 2] : vector<1x8x128xf32> to vector<1xf32>
      %105 = vector.shape_cast %104 : vector<1xf32> to vector<1x1x1xf32>
      %106 = vector.extract %105[0, 0, 0] : f32 from vector<1x1x1xf32>
      %cst_63 = arith.constant 0.000000e+00 : f32
      %107 = arith.cmpf ogt, %94, %cst_63 : f32
      %108 = arith.mulf %96, %101 : f32
      %109 = arith.subf %108, %106 : f32
      %cst_64 = arith.constant 0.000000e+00 : f32
      %110 = arith.select %107, %109, %cst_64 : f32
      %c0_65 = arith.constant 0 : index
      %c0_66 = arith.constant 0 : index
      %111 = vector.load %arg9[%c0_65, %c0_66] : memref<8x128xf32, #tpu.memory_space<vmem>>, vector<8x128xf32>
      %112 = vector.shape_cast %111 : vector<8x128xf32> to vector<1x8x128xf32>
      %cst_67 = arith.constant dense<0.000000e+00> : vector<1xf32>
      %113 = vector.multi_reduction <add>, %112, %cst_67 [1, 2] : vector<1x8x128xf32> to vector<1xf32>
      %114 = vector.shape_cast %113 : vector<1xf32> to vector<1x1x1xf32>
      %115 = vector.extract %114[0, 0, 0] : f32 from vector<1x1x1xf32>
      %c0_68 = arith.constant 0 : index
      %c0_69 = arith.constant 0 : index
      %116 = vector.load %arg10[%c0_68, %c0_69] : memref<8x128xf32, #tpu.memory_space<vmem>>, vector<8x128xf32>
      %117 = vector.shape_cast %116 : vector<8x128xf32> to vector<1x8x128xf32>
      %cst_70 = arith.constant dense<0.000000e+00> : vector<1xf32>
      %118 = vector.multi_reduction <add>, %117, %cst_70 [1, 2] : vector<1x8x128xf32> to vector<1xf32>
      %119 = vector.shape_cast %118 : vector<1xf32> to vector<1x1x1xf32>
      %120 = vector.extract %119[0, 0, 0] : f32 from vector<1x1x1xf32>
      %121 = arith.divf %115, %120 : f32
      %122 = arith.addf %110, %121 : f32
      %123 = vector.broadcast %122 : f32 to vector<1x1xf32>
      %c0_71 = arith.constant 0 : index
      %c0_72 = arith.constant 0 : index
      %124 = vector.load %arg4[%c0_71, %c0_72] : memref<1x1xf32, #tpu.memory_space<vmem>>, vector<1x1xf32>
      tpu.vector_store %arg4[%c0_71, %c0_72], %123 {strides = array<i32>} : memref<1x1xf32, #tpu.memory_space<vmem>>, vector<1x1xf32>,
    } else {
    }
    return
  }
  func.func @transform_0(%arg0: i32, %arg1: memref<1xi32, #tpu.memory_space<smem>>) -> (i32, i32, i32) {
    %c0_i32 = arith.constant 0 : i32
    %c0_i32_0 = arith.constant 0 : i32
    %c0_i32_1 = arith.constant 0 : i32
    return %arg0, %c0_i32, %c0_i32_0 : i32, i32, i32
  }
  func.func @transform_1(%arg0: i32, %arg1: memref<1xi32, #tpu.memory_space<smem>>) -> (i32, i32, i32) {
    %c0_i32 = arith.constant 0 : i32
    %c0_i32_0 = arith.constant 0 : i32
    %c0_i32_1 = arith.constant 0 : i32
    return %arg0, %c0_i32, %c0_i32_0 : i32, i32, i32
  }
  func.func @transform_2(%arg0: i32, %arg1: memref<1xi32, #tpu.memory_space<smem>>) -> (i32, i32) {
    %c0_i32 = arith.constant 0 : i32
    %c0_i32_0 = arith.constant 0 : i32
    %c0_i32_1 = arith.constant 0 : i32
    return %c0_i32, %c0_i32_0 : i32, i32
  }
}

</mosaic_0001>

<llo_original>
// kernel: tpu_custom_call.1
$region0: #{tpu_custom_call.1}
  #allocation0 [shape = 'u32[]', space=smem, size = 0x4, offset = 0x4, fixed_abs, tag = 'smem constant byte address 0x4 - core index']
  #allocation1 [shape = 'u32[144,128]{1,0:T(1,128)}', space=vmem, size = 0x12000, scoped, tag = 'internal scratch']
  #allocation2 [shape = 'f32[8,128]{1,0:T(8,128)}', space=vmem, size = 0x1000, scoped, tag = 'scratch operand']
  #allocation3 [shape = 'f32[8,128]{1,0:T(8,128)}', space=vmem, size = 0x1000, scoped, tag = 'scratch operand']
  #allocation4 [shape = 'f32[8,128]{1,0:T(8,128)}', space=vmem, size = 0x1000, scoped, tag = 'scratch operand']
  #allocation5 [shape = 'f32[8,128]{1,0:T(8,128)}', space=vmem, size = 0x1000, scoped, tag = 'scratch operand']
  #allocation6 [shape = 'f32[8,128]{1,0:T(8,128)}', space=vmem, size = 0x1000, scoped, tag = 'scratch operand']
  #allocation7 [shape = 'f32[8,128]{1,0:T(8,128)}', space=vmem, size = 0x1000, scoped, tag = 'scratch operand']
  #allocation8 [shape = 's32[1]{0}', space=sflag, size = 0x4, scoped, tag = 'scoped memory for tpu_custom_call.1']
  #allocation9 [shape = 's32[1]{0:T(128)S(6)}', space=smem, size = 0x200, scoped, tag = 'prefetched SMEM operand 0']
  %s0 = inlined_call_operand.<no memory space> [shape: s32[1], index: 0, kind: input, shape index: {}]
  %s1 = inlined_call_operand.hbm [shape: f32[2,8,128], index: 1, kind: input, shape index: {}]
  %s2 = inlined_call_operand.hbm [shape: f32[2,8,128], index: 2, kind: input, shape index: {}]
  %s3 = inlined_call_operand.hbm [shape: f32[1,1], index: 3, kind: output, shape index: {}]
  %s4 = sld [smem:[#allocation0]]
  $region34: #{tpu_custom_call.1} parent=0
    _
  %s6 = ssub.s32 1, %s4
  %s7 = scalar_select 0, %s6, %s4
  %8 = sst [smem:[#allocation9]] %s0
  $region1: #{tpu_custom_call.1} parent=0
    #allocation10 [shape = 'u8[8192]{0}', space=vmem, size = 0x2000, scoped, tag = 'input window, operand 1, single buffered']
    #allocation11 [shape = 's32[1]{0}', space=sflag, size = 0x4, scoped, tag = 'scoped memory for tpu_custom_call.1']
    #allocation12 [shape = 's32[1]{0}', space=sflag, size = 0x4, scoped, tag = 'scoped memory for tpu_custom_call.1']
    #allocation13 [shape = 'u8[8192]{0}', space=vmem, size = 0x2000, scoped, tag = 'input window, operand 2, single buffered']
    #allocation14 [shape = 's32[1]{0}', space=sflag, size = 0x4, scoped, tag = 'scoped memory for tpu_custom_call.1']
    #allocation15 [shape = 'u8[512]{0}', space=vmem, size = 0x400, scoped, tag = 'output window, operand 0, single buffered']
    %9 = vsyncpa [#allocation11], 0
    %10 = vsyncpa [#allocation14], 0
    %11 = vsyncpa [#allocation12], 0
    // Predicated region
    $region2: #{tpu_custom_call.1} parent=1 // pred_check
      _
    $region3: #{tpu_custom_call.1} parent=1 // pred_check_branch
      %13 = sbr.rel (0) target = $region5
    $region4: #{tpu_custom_call.1} parent=1 // pred_region
      %s15 = ssub.s32 256, 256
      %16 = vsyncadd [#allocation11], %s15
      %s17 = sshll.u32 [#allocation10], 4
      %s18 = int_to_ptr.vmem [resolvable:$true] %s17
      %23 = dma.hbm_to_vmem [thread:$0]  %s1, 256, %s18, [#allocation11], 128, 128, 8
    $region5: #{tpu_custom_call.1} parent=1 // pred_fallthru
      _
    // Predicated region
    $region6: #{tpu_custom_call.1} parent=1 // pred_check
      _
    $region7: #{tpu_custom_call.1} parent=1 // pred_check_branch
      %25 = sbr.rel (0) target = $region9
    $region8: #{tpu_custom_call.1} parent=1 // pred_region
      %s27 = ssub.s32 256, 256
      %28 = vsyncadd [#allocation14], %s27
      %s29 = sshll.u32 [#allocation13], 4
      %s30 = int_to_ptr.vmem [resolvable:$true] %s29
      %35 = dma.hbm_to_vmem [thread:$0]  %s2, 256, %s30, [#allocation14], 128, 128, 8
    $region9: #{tpu_custom_call.1} parent=1 // pred_fallthru
      _
    // Predicated region
    $region10: #{tpu_custom_call.1} parent=1 // pred_check
      _
    $region11: #{tpu_custom_call.1} parent=1 // pred_check_branch
      %37 = sbr.rel (0) target = $region13
    $region12: #{tpu_custom_call.1} parent=1 // pred_region
      %38 = dma.done [#allocation11], 256
    $region13: #{tpu_custom_call.1} parent=1 // pred_fallthru
      _
    // Predicated region
    $region14: #{tpu_custom_call.1} parent=1 // pred_check
      _
    $region15: #{tpu_custom_call.1} parent=1 // pred_check_branch
      %40 = sbr.rel (0) target = $region17
    $region16: #{tpu_custom_call.1} parent=1 // pred_region
      %41 = dma.done [#allocation14], 256
    $region17: #{tpu_custom_call.1} parent=1 // pred_fallthru
      _
    %p42 = scmp.eq.s32.totalorder 0, 0
    // Predicated region
    $region18: #{tpu_custom_call.1} parent=1 // pred_check
      %p43 = pneg %p42
    $region19: #{tpu_custom_call.1} parent=1 // pred_check_branch
      %45 = sbr.rel (%p43) target = $region21
    $region20: #{tpu_custom_call.1} parent=1 // pred_region
      %46 = vst [vmem:[#allocation2] sm:$0xff] -inf
      %47 = vst [vmem:[#allocation3] sm:$0xff] 0.0
      %48 = vst [vmem:[#allocation4] sm:$0xff] 0.0
      %49 = vst [vmem:[#allocation5] sm:$0xff] 0.0
      %50 = vst [vmem:[#allocation6] sm:$0xff] 0.0
      %51 = vst [vmem:[#allocation7] sm:$0xff] 0.0
    $region21: #{tpu_custom_call.1} parent=1 // pred_fallthru
      _
    %v52 = vld [vmem:[#allocation10] sm:$0xff]
    %v53 = vld [vmem:[#allocation10 + $0x8] sm:$0xff]
    %v54 = vld [vmem:[#allocation13] sm:$0xff]
    %v55 = vld [vmem:[#allocation13 + $0x8] sm:$0xff]
    %s56 = sld [smem:[#allocation9]]
    %v57 = vlaneseq
    %v58 = vshrl.u32 %v57, 7
    %v59 = vlaneseq
    %v60 = vand.u32 %v59, 127
    %s61 = smul.u32 0, 2
    %v62 = vstv %s61
    %v63 = vadd.s32 %v62, 1
    %v64 = vmul.u32 %v62, 8
    %v65 = vmul.u32 %v63, 8
    %v66 = vadd.s32 %v64, %v58
    %v67 = vadd.s32 %v65, %v58
    %v68 = vmul.u32 %v66, 128
    %v69 = vmul.u32 %v67, 128
    %v70 = vadd.s32 %v68, %v60
    %v71 = vadd.s32 %v69, %v60
    %v72 = vstv %s56
    %vm73 = vcmp.lt.s32.totalorder %v70, %v72
    %vm74 = vcmp.lt.s32.totalorder %v71, %v72
    %vm75 = vcmp.ne.f32.partialorder %v54, 0.0
    %vm76 = vcmp.ne.f32.partialorder %v55, 0.0
    %vm77 = vmand %vm75, %vm73
    %vm78 = vmand %vm76, %vm74
    %vm79 = vcmp.eq.f32.partialorder %v54, 0.0
    %vm80 = vcmp.eq.f32.partialorder %v55, 0.0
    %vm81 = vmand %vm79, %vm73
    %vm82 = vmand %vm80, %vm74
    %v83 = vsel %vm77, %v52, -inf
    %v84 = vsel %vm78, %v53, -inf
    %v85 = vmax.f32 %v83, %v84
    %v86 = vld [vmem:[#allocation2] sm:$0xff]
    %v87 = vmax.f32 %v86, %v85
    %vm88 = vcmp.eq.f32.partialorder %v87, -inf
    %v89 = vsel %vm88, 0.0, %v87
    %v90 = vsub.f32 %v52, %v89
    %v91 = vsub.f32 %v53, %v89
    %v92 = vmul.f32 %v90, 1.442695
    %v93 = vpow.pop %v92
    %v94 = vmul.f32 %v91, 1.442695
    %v95 = vpow.pop %v94
    %v96 = vsel %vm77, %v93, 0.0
    %v97 = vsel %vm78, %v95, 0.0
    %v98 = vld [vmem:[#allocation3] sm:$0xff]
    %v99 = vsub.f32 %v86, %v89
    %v100 = vmul.f32 %v99, 1.442695
    %v101 = vpow.pop %v100
    %v102 = vmul.f32 %v98, %v101
    %v103 = vadd.f32 %v96, %v97
    %v104 = vadd.f32 %v102, %v103
    %105 = vst [vmem:[#allocation3] sm:$0xff] %v104
    %106 = vst [vmem:[#allocation2] sm:$0xff] %v87
    %v107 = vld [vmem:[#allocation4] sm:$0xff]
    %v108 = vsel %vm77, %v54, 0.0
    %v109 = vsel %vm78, %v55, 0.0
    %v110 = vadd.f32 %v108, %v109
    %v111 = vadd.f32 %v107, %v110
    %112 = vst [vmem:[#allocation4] sm:$0xff] %v111
    %v113 = vld [vmem:[#allocation5] sm:$0xff]
    %v114 = vmul.f32 %v54, %v52
    %v115 = vmul.f32 %v55, %v53
    %v116 = vsel %vm77, %v114, 0.0
    %v117 = vsel %vm78, %v115, 0.0
    %v118 = vadd.f32 %v116, %v117
    %v119 = vadd.f32 %v113, %v118
    %120 = vst [vmem:[#allocation5] sm:$0xff] %v119
    %v121 = vld [vmem:[#allocation6] sm:$0xff]
    %v122 = vand.u32 2147483647, %v52
    %v123 = vand.u32 2147483647, %v53
    %v124 = vsel %vm81, %v122, 0.0
    %v125 = vsel %vm82, %v123, 0.0
    %v126 = vadd.f32 %v124, %v125
    %v127 = vadd.f32 %v121, %v126
    %128 = vst [vmem:[#allocation6] sm:$0xff] %v127
    %v129 = vld [vmem:[#allocation7] sm:$0xff]
    %v130 = vsel %vm81, 1, 0
    %v131 = vsel %vm82, 1, 0
    %v132 = vcvt.s32.f32 %v130
    %v133 = vcvt.s32.f32 %v131
    %v134 = vadd.f32 %v132, %v133
    %v135 = vadd.f32 %v129, %v134
    %136 = vst [vmem:[#allocation7] sm:$0xff] %v135
    // Predicated region
    $region22: #{tpu_custom_call.1} parent=1 // pred_check
      %p137 = pneg %p42
    $region23: #{tpu_custom_call.1} parent=1 // pred_check_branch
      %139 = sbr.rel (%p137) target = $region25
    $region24: #{tpu_custom_call.1} parent=1 // pred_region
      %v140 = vld [vmem:[#allocation2] sm:$0xff]
      %141 = vmax.xlane.f32.xlu0 %v140
      %v142 = vpop.xlane.xlu0 %141
      %v143 = vrot.slane %v142, 4
      %v144 = vmax.f32 %v142, %v143
      %v145 = vrot.slane %v144, 2
      %v146 = vmax.f32 %v144, %v145
      %v147 = vrot.slane %v146, 1
      %v148 = vmax.f32 %v146, %v147
      %s149 = vtos %v148
      %p150 = scmp.eq.f32.partialorder %s149, -inf
      %s151 = scalar_select %p150, 0.0, %s149
      %v152 = vld [vmem:[#allocation3] sm:$0xff]
      %v153 = vstv %s151
      %v154 = vsub.f32 %v140, %v153
      %v155 = vmul.f32 %v154, 1.442695
      %v156 = vpow.pop %v155
      %v157 = vmul.f32 %v152, %v156
      %158 = vadd.xlane.f32.xlu0 %v157
      %v159 = vpop.xlane.xlu0 %158
      %v160 = vrot.slane %v159, 4
      %v161 = vadd.f32 %v159, %v160
      %v162 = vrot.slane %v161, 2
      %v163 = vadd.f32 %v161, %v162
      %v164 = vrot.slane %v163, 1
      %v165 = vadd.f32 %v163, %v164
      %s166 = vtos %v165
      %v167 = vstv %s166
      %v168 = vlog2.pop %v167
      %v169 = vmul.f32 %v168, 0.6931472
      %s170 = vtos %v169
      %s171 = sadd.f32 %s170, %s149
      %v172 = vld [vmem:[#allocation4] sm:$0xff]
      %173 = vadd.xlane.f32.xlu0 %v172
      %v174 = vpop.xlane.xlu0 %173
      %v175 = vrot.slane %v174, 4
      %v176 = vadd.f32 %v174, %v175
      %v177 = vrot.slane %v176, 2
      %v178 = vadd.f32 %v176, %v177
      %v179 = vrot.slane %v178, 1
      %v180 = vadd.f32 %v178, %v179
      %s181 = vtos %v180
      %v182 = vld [vmem:[#allocation5] sm:$0xff]
      %183 = vadd.xlane.f32.xlu0 %v182
      %v184 = vpop.xlane.xlu0 %183
      %v185 = vrot.slane %v184, 4
      %v186 = vadd.f32 %v184, %v185
      %v187 = vrot.slane %v186, 2
      %v188 = vadd.f32 %v186, %v187
      %v189 = vrot.slane %v188, 1
      %v190 = vadd.f32 %v188, %v189
      %s191 = vtos %v190
      %p192 = scmp.gt.f32.partialorder %s166, 0.0
      %s193 = smul.f32 %s171, %s181
      %s194 = ssub.f32 %s193, %s191
      %s195 = scalar_select %p192, %s194, 0.0
      %v196 = vld [vmem:[#allocation6] sm:$0xff]
      %197 = vadd.xlane.f32.xlu0 %v196
      %v198 = vpop.xlane.xlu0 %197
      %v199 = vrot.slane %v198, 4
      %v200 = vadd.f32 %v198, %v199
      %v201 = vrot.slane %v200, 2
      %v202 = vadd.f32 %v200, %v201
      %v203 = vrot.slane %v202, 1
      %v204 = vadd.f32 %v202, %v203
      %s205 = vtos %v204
      %v206 = vld [vmem:[#allocation7] sm:$0xff]
      %207 = vadd.xlane.f32.xlu0 %v206
      %v208 = vpop.xlane.xlu0 %207
      %v209 = vrot.slane %v208, 4
      %v210 = vadd.f32 %v208, %v209
      %v211 = vrot.slane %v210, 2
      %v212 = vadd.f32 %v210, %v211
      %v213 = vrot.slane %v212, 1
      %v214 = vadd.f32 %v212, %v213
      %s215 = vtos %v214
      %v216 = vstv %s215
      %v217 = vrcp.pop %v216
      %s218 = vtos %v217
      %s219 = smul.f32 %s205, %s218
      %s220 = sadd.f32 %s195, %s219
      %v221 = vstv %s220
      %vm222 = vcmask 0
      %223 = vst.msk [vmem:[#allocation15] sm:$0x1] %vm222, %v221
    $region25: #{tpu_custom_call.1} parent=1 // pred_fallthru
      _
    // Predicated region
    $region26: #{tpu_custom_call.1} parent=1 // pred_check
      _
    $region27: #{tpu_custom_call.1} parent=1 // pred_check_branch
      %225 = sbr.rel (0) target = $region29
    $region28: #{tpu_custom_call.1} parent=1 // pred_region
      %s227 = ssub.s32 16, 16
      %228 = vsyncadd [#allocation12], %s227
      %s230 = sshll.u32 [#allocation15], 4
      %s231 = int_to_ptr.vmem [resolvable:$true] %s230
      %233 = dma.vmem_to_hbm [thread:$0]  %s231, 16, %s3, [#allocation12]
    $region29: #{tpu_custom_call.1} parent=1 // pred_fallthru
      _
    // Predicated region
    $region30: #{tpu_custom_call.1} parent=1 // pred_check
      _
    $region31: #{tpu_custom_call.1} parent=1 // pred_check_branch
      %235 = sbr.rel (0) target = $region33
    $region32: #{tpu_custom_call.1} parent=1 // pred_region
      %236 = dma.done [#allocation12], 16
    $region33: #{tpu_custom_call.1} parent=1 // pred_fallthru
      _
    %237 = vsyncpa [#allocation11], 1
    %238 = vsyncpa [#allocation14], 1
    %239 = vsyncpa [#allocation12], 1

</llo_original>
